<compile_context>
chip_gen: v6e
topology: v6e:2x2x1
jax: 0.10.0
libtpu: 0.0.40
codegen_flags: <defaults>
</compile_context>

<pallas_src>
import functools

import jax
import jax.numpy as jnp
from jax.experimental import pallas as pl
from jax.experimental.pallas import tpu as pltpu

KW = 4          # kernel size
PADW = 2        # ceil((4-1)/2)
NEG_SLOPE = 0.2
BN_EPS = 1e-5

TM_MAX = 1024   # rows (output pixels) per tile
TN_MAX = 512    # output channels per tile (covers full Cout -> single j tile)
TK_MAX = 2048   # contraction per tile
VMEM_LIMIT_BYTES = 32 * 1024 * 1024


def _round_up(x, m):
    return (x + m - 1) // m * m


def _tile(dim, max_tile, align):
    """Balanced tile: <= max_tile, multiple of `align`, near-even split of dim."""
    ntiles = -(-dim // max_tile)
    return _round_up(-(-dim // ntiles), align)


# ---------------------------------------------------------------------------
# Pallas kernels
# ---------------------------------------------------------------------------
def _conv_gemm_kernel(a_ref, w_ref, b_ref, o_ref, sum_ref, sq_ref, acc_ref, *,
                      apply_leaky):
    """Tiled GEMM (TM,TK)bf16 @ (TK,TN)bf16 -> fp32 acc.

    Epilogue at the last K step: add bias, emit per-channel partial sum and
    sum-of-squares (fused BN statistics), optional LeakyReLU, store bf16.
    """
    @pl.when(pl.program_id(2) == 0)
    def _():
        acc_ref[...] = jnp.zeros_like(acc_ref)

    acc_ref[...] += jnp.dot(a_ref[...], w_ref[...],
                            preferred_element_type=jnp.float32)

    @pl.when(pl.program_id(2) == pl.num_programs(2) - 1)
    def _():
        y = acc_ref[...] + b_ref[...]                  # (TM,TN) + (1,TN)
        tn = y.shape[1]
        # Per-channel partial stats on the pre-activation (what BN normalizes).
        s = jnp.sum(y, axis=0, keepdims=True)          # (1, TN)
        sq = jnp.sum(y * y, axis=0, keepdims=True)     # (1, TN)
        sum_ref[...] = jnp.broadcast_to(s, (8, tn))[None]
        sq_ref[...] = jnp.broadcast_to(sq, (8, tn))[None]
        if apply_leaky:
            y = jnp.where(y >= 0, y, NEG_SLOPE * y)
        o_ref[...] = y.astype(o_ref.dtype)


def _bn_apply_kernel(x_ref, scale_ref, shift_ref, o_ref):
    """y = x*scale + shift, then LeakyReLU; bf16 in/out, fp32 math."""
    y = x_ref[...].astype(jnp.float32) * scale_ref[...] + shift_ref[...]
    o_ref[...] = jnp.where(y >= 0, y, NEG_SLOPE * y).astype(o_ref.dtype)


# ---------------------------------------------------------------------------
# Layer wrappers (im2col glue + tiled pallas_call)
# ---------------------------------------------------------------------------
def conv2d_pallas(x_nhwc, w, b, *, stride, apply_leaky):
    """x_nhwc: (N,H,W,Cin) bf16; w: (KH,KW,Cin,Cout) fp32; b: (Cout,) fp32.

    Returns (out2d_padded_bf16 (m_pad, n_pad), csum (n_pad,), csq (n_pad,), meta).
    csum/csq are per-channel sum / sum-of-squares of the pre-activation
    (conv + bias) over the m real output pixels (for fused BatchNorm stats).
    """
    n, h, wd, cin = x_nhwc.shape
    kh, kw, _, cout = w.shape
    xp = jnp.pad(x_nhwc, ((0, 0), (PADW, PADW), (PADW, PADW), (0, 0)))
    hp, wp = h + 2 * PADW, wd + 2 * PADW
    ho = (hp - kh) // stride + 1
    wo = (wp - kw) // stride + 1

    # im2col patch matrix, emitted directly in bf16.
    xp16 = xp.astype(jnp.bfloat16)
    patches = [xp16[:, i:i + stride * (ho - 1) + 1:stride,
                    j:j + stride * (wo - 1) + 1:stride, :]
               for i in range(kh) for j in range(kw)]
    p = jnp.concatenate(patches, axis=-1).reshape(n * ho * wo, kh * kw * cin)

    m, k = p.shape
    tm = _tile(m, TM_MAX, 8)
    tk = _tile(k, TK_MAX, 128)
    tn = _tile(cout, TN_MAX, 128)
    m_pad = _round_up(m, tm)
    k_pad = _round_up(k, tk)
    n_pad = _round_up(cout, tn)

    p = jnp.pad(p, ((0, m_pad - m), (0, k_pad - k)))
    wmat = jnp.pad(w.reshape(k, cout).astype(jnp.bfloat16),
                   ((0, k_pad - k), (0, n_pad - cout)))
    bvec = jnp.pad(b.astype(jnp.float32), (0, n_pad - cout)).reshape(1, n_pad)

    grid = (m_pad // tm, n_pad // tn, k_pad // tk)
    out2d, psum, psq = pl.pallas_call(
        functools.partial(_conv_gemm_kernel, apply_leaky=apply_leaky),
        out_shape=(jax.ShapeDtypeStruct((m_pad, n_pad), jnp.bfloat16),
                   jax.ShapeDtypeStruct((grid[0], 8, n_pad), jnp.float32),
                   jax.ShapeDtypeStruct((grid[0], 8, n_pad), jnp.float32)),
        grid_spec=pltpu.PrefetchScalarGridSpec(
            num_scalar_prefetch=0, grid=grid,
            in_specs=[
                pl.BlockSpec((tm, tk), lambda i, j, kk: (i, kk)),
                pl.BlockSpec((tk, tn), lambda i, j, kk: (kk, j)),
                pl.BlockSpec((1, tn), lambda i, j, kk: (0, j)),
            ],
            out_specs=(
                pl.BlockSpec((tm, tn), lambda i, j, kk: (i, j)),
                pl.BlockSpec((1, 8, tn), lambda i, j, kk: (i, 0, j)),
                pl.BlockSpec((1, 8, tn), lambda i, j, kk: (i, 0, j)),
            ),
            scratch_shapes=[pltpu.VMEM((tm, tn), jnp.float32)]),
        compiler_params=pltpu.CompilerParams(
            dimension_semantics=("parallel", "parallel", "arbitrary"),
            vmem_limit_bytes=VMEM_LIMIT_BYTES),
    )(p, wmat, bvec)

    # Zero-padded rows of the patch matrix produce exactly `bias` in the
    # epilogue; remove their contribution from the fused per-channel stats.
    pad_rows = m_pad - m
    csum = jnp.sum(psum[:, 0, :], axis=0) - pad_rows * bvec[0]
    csq = jnp.sum(psq[:, 0, :], axis=0) - pad_rows * (bvec[0] ** 2)

    meta = dict(n=n, ho=ho, wo=wo, cout=cout, m=m, tm=tm, n_pad=n_pad)
    return out2d, csum, csq, meta


def bn_leaky_apply_pallas(out2d, csum, csq, meta, gamma, beta):
    """Training-mode (biased) batch-norm + LeakyReLU on the padded conv output."""
    m, tm, n_pad, cout = meta["m"], meta["tm"], meta["n_pad"], meta["cout"]
    m_pad = out2d.shape[0]

    mean = csum / m
    var = jnp.maximum(csq / m - mean * mean, 0.0)        # biased variance
    gamma_p = jnp.pad(gamma.astype(jnp.float32), (0, n_pad - cout))
    beta_p = jnp.pad(beta.astype(jnp.float32), (0, n_pad - cout))
    scale_v = gamma_p * jax.lax.rsqrt(var + BN_EPS)
    shift_v = beta_p - mean * scale_v
    scale = scale_v.reshape(1, n_pad)
    shift = shift_v.reshape(1, n_pad)

    grid = (m_pad // tm,)
    return pl.pallas_call(
        _bn_apply_kernel,
        out_shape=jax.ShapeDtypeStruct((m_pad, n_pad), jnp.bfloat16),
        grid_spec=pltpu.PrefetchScalarGridSpec(
            num_scalar_prefetch=0, grid=grid,
            in_specs=[pl.BlockSpec((tm, n_pad), lambda i: (i, 0)),
                      pl.BlockSpec((1, n_pad), lambda i: (0, 0)),
                      pl.BlockSpec((1, n_pad), lambda i: (0, 0))],
            out_specs=pl.BlockSpec((tm, n_pad), lambda i: (i, 0))),
        compiler_params=pltpu.CompilerParams(
            dimension_semantics=("parallel",),
            vmem_limit_bytes=VMEM_LIMIT_BYTES),
    )(out2d, scale, shift)


# ---------------------------------------------------------------------------
# NLayerDiscriminator: parameter construction + forward
# ---------------------------------------------------------------------------
def init_params(key, input_nc, ndf=64, n_layers=3):
    """Deterministic synthetic parameters matching the module's layer shapes."""
    params = []

    def conv_param(key, cin, cout):
        kw_, kb_ = jax.random.split(key)
        scale = 1.0 / jnp.sqrt(cin * KW * KW)
        w = jax.random.uniform(kw_, (KW, KW, cin, cout), jnp.float32, -scale, scale)
        b = jax.random.uniform(kb_, (cout,), jnp.float32, -scale, scale)
        return w, b

    keys = jax.random.split(key, n_layers + 2)
    # layer 0: conv(input_nc -> ndf, stride 2) + leaky
    w, b = conv_param(keys[0], input_nc, ndf)
    params.append(dict(w=w, b=b, stride=2, norm=False, leaky=True))
    nf = ndf
    # layers 1 .. n_layers-1: conv stride 2 + BN + leaky
    for n in range(1, n_layers):
        nf_prev, nf = nf, min(nf * 2, 512)
        w, b = conv_param(keys[n], nf_prev, nf)
        params.append(dict(w=w, b=b, stride=2, norm=True, leaky=True,
                           gamma=jnp.ones((nf,), jnp.float32),
                           beta=jnp.zeros((nf,), jnp.float32)))
    # layer n_layers: conv stride 1 + BN + leaky
    nf_prev, nf = nf, min(nf * 2, 512)
    w, b = conv_param(keys[n_layers], nf_prev, nf)
    params.append(dict(w=w, b=b, stride=1, norm=True, leaky=True,
                       gamma=jnp.ones((nf,), jnp.float32),
                       beta=jnp.zeros((nf,), jnp.float32)))
    # final: conv(nf -> 1, stride 1), no norm/activation (use_sigmoid=False)
    w, b = conv_param(keys[n_layers + 1], nf, 1)
    params.append(dict(w=w, b=b, stride=1, norm=False, leaky=False))
    return params


def nlayer_discriminator_forward(params, x_nchw):
    """Returns (final_output, intermediate_features), all NCHW (getIntermFeat=True)."""
    # NCHW -> NHWC once, bf16 activations end-to-end.
    x = jnp.transpose(x_nchw, (0, 2, 3, 1)).astype(jnp.bfloat16)
    feats_nhwc = []
    for layer in params:
        out2d, csum, csq, meta = conv2d_pallas(
            x, layer["w"], layer["b"], stride=layer["stride"],
            apply_leaky=(layer["leaky"] and not layer["norm"]))
        if layer["norm"]:
            out2d = bn_leaky_apply_pallas(out2d, csum, csq, meta,
                                          layer["gamma"], layer["beta"])
        x = out2d[:meta["m"], :meta["cout"]].reshape(
            meta["n"], meta["ho"], meta["wo"], meta["cout"])
        feats_nhwc.append(x)
    # transpose back to NCHW (and fp32) only for the tensors the caller consumes
    feats_nchw = [jnp.transpose(f, (0, 3, 1, 2)).astype(jnp.float32)
                  for f in feats_nhwc]
    return feats_nchw[-1], feats_nchw


# ---------------------------------------------------------------------------
# Pure-JAX fp32 reference (correctness sanity check)
# ---------------------------------------------------------------------------
def reference_forward(params, x_nchw):
    x = x_nchw
    feats = []
    for layer in params:
        w = jnp.transpose(layer["w"], (3, 2, 0, 1))      # (Cout, Cin, KH, KW)
        x = jax.lax.conv_general_dilated(
            x, w, window_strides=(layer["stride"], layer["stride"]),
            padding=((PADW, PADW), (PADW, PADW)),
            dimension_numbers=("NCHW", "OIHW", "NCHW"))
        x = x + layer["b"][None, :, None, None]
        if layer["norm"]:
            mean = jnp.mean(x, axis=(0, 2, 3), keepdims=True)
            var = jnp.mean((x - mean) ** 2, axis=(0, 2, 3), keepdims=True)
            x = (x - mean) * jax.lax.rsqrt(var + BN_EPS)
            x = x * layer["gamma"][None, :, None, None] + layer["beta"][None, :, None, None]
            x = jnp.where(x >= 0, x, NEG_SLOPE * x)
        elif layer["leaky"]:
            x = jnp.where(x >= 0, x, NEG_SLOPE * x)
        feats.append(x)
    return feats[-1], feats


if __name__ == "__main__":
    key = jax.random.PRNGKey(0)
    k_param, k_x = jax.random.split(key)

    batch, input_nc, spatial, ndf, n_layers = 2, 4, 16, 8, 3
    x = jax.random.normal(k_x, (batch, input_nc, spatial, spatial), jnp.float32)
    params = init_params(k_param, input_nc, ndf=ndf, n_layers=n_layers)

    final, feats = nlayer_discriminator_forward(params, x)
    final = jax.block_until_ready(final)
    feats = [jax.block_until_ready(f) for f in feats]

    ref_final, ref_feats = reference_forward(params, x)
    assert len(feats) == n_layers + 2
    for got, want in zip(feats, ref_feats):
        assert got.shape == want.shape
        err = float(jnp.max(jnp.abs(got - want)))
        # bf16 MXU operands + bf16 stored activations (fp32 accumulation) ->
        # tolerance scaled to magnitude; compounds layer-to-layer.
        tol = 6e-2 * (1.0 + float(jnp.max(jnp.abs(want))))
        assert err < tol, (err, tol)

    print("KERNEL_OK")
</pallas_src>

<mosaic_0001>
module attributes {stable_mosaic.version = 11 : i64} {
  func.func @_conv_gemm_kernel(%arg0: i32, %arg1: i32, %arg2: i32, %arg3: memref<168x128xbf16, #tpu.memory_space<vmem>>, %arg4: memref<128x128xbf16, #tpu.memory_space<vmem>>, %arg5: memref<1x128xf32, #tpu.memory_space<vmem>>, %arg6: memref<168x128xbf16, #tpu.memory_space<vmem>>, %arg7: memref<1x8x128xf32, #tpu.memory_space<vmem>>, %arg8: memref<1x8x128xf32, #tpu.memory_space<vmem>>, %arg9: memref<168x128xf32, #tpu.memory_space<vmem>>) attributes {dimension_semantics = [#tpu.dimension_semantics<parallel>, #tpu.dimension_semantics<parallel>, #tpu.dimension_semantics<arbitrary>], iteration_bounds = array<i64: 1, 1, 1>, scalar_prefetch = 0 : i64, scratch_operands = 1 : i64, tpu.core_type = #tpu.core_type<tc>, window_params = [{transform_indices = @transform_0, window_bounds = array<i64: 168, 128>}, {transform_indices = @transform_1, window_bounds = array<i64: 128, 128>}, {transform_indices = @transform_2, window_bounds = array<i64: 1, 128>}, {transform_indices = @transform_3, window_bounds = array<i64: 168, 128>}, {transform_indices = @transform_4, window_bounds = array<i64: 1, 8, 128>}, {transform_indices = @transform_5, window_bounds = array<i64: 1, 8, 128>}]} {
    %c0_i32 = arith.constant 0 : i32
    %0 = arith.cmpi eq, %arg2, %c0_i32 : i32
    %1 = arith.extui %0 : i1 to i32
    %c0_i32_0 = arith.constant 0 : i32
    %2 = arith.cmpi ne, %1, %c0_i32_0 : i32
    scf.if %2 {
      %cst_10 = arith.constant 0.000000e+00 : f32
      %12 = vector.broadcast %cst_10 : f32 to vector<168x128xf32>
      %c0_11 = arith.constant 0 : index
      %c0_12 = arith.constant 0 : index
      %13 = vector.load %arg9[%c0_11, %c0_12] : memref<168x128xf32, #tpu.memory_space<vmem>>, vector<168x128xf32>
      tpu.vector_store %arg9[%c0_11, %c0_12], %12 {strides = array<i32>} : memref<168x128xf32, #tpu.memory_space<vmem>>, vector<168x128xf32>,
    } else {
    }
    %c0 = arith.constant 0 : index
    %c0_1 = arith.constant 0 : index
    %3 = vector.load %arg9[%c0, %c0_1] : memref<168x128xf32, #tpu.memory_space<vmem>>, vector<168x128xf32>
    %c0_2 = arith.constant 0 : index
    %c0_3 = arith.constant 0 : index
    %4 = vector.load %arg3[%c0_2, %c0_3] : memref<168x128xbf16, #tpu.memory_space<vmem>>, vector<168x128xbf16>
    %c0_4 = arith.constant 0 : index
    %c0_5 = arith.constant 0 : index
    %5 = vector.load %arg4[%c0_4, %c0_5] : memref<128x128xbf16, #tpu.memory_space<vmem>>, vector<128x128xbf16>
    %cst = arith.constant dense<0.000000e+00> : vector<168x128xf32>
    %6 = tpu.matmul %4, %5, %cst {dimension_numbers = #tpu.dot_dimension_numbers<[1], [0], [0], [1], [0, 0, 1, 1], [], []>} : vector<168x128xbf16>, vector<128x128xbf16>, vector<168x128xf32> -> vector<168x128xf32>
    %7 = arith.addf %3, %6 : vector<168x128xf32>
    %c0_6 = arith.constant 0 : index
    %c0_7 = arith.constant 0 : index
    %8 = vector.load %arg9[%c0_6, %c0_7] : memref<168x128xf32, #tpu.memory_space<vmem>>, vector<168x128xf32>
    tpu.vector_store %arg9[%c0_6, %c0_7], %7 {strides = array<i32>} : memref<168x128xf32, #tpu.memory_space<vmem>>, vector<168x128xf32>,
    %c0_i32_8 = arith.constant 0 : i32
    %9 = arith.cmpi eq, %arg2, %c0_i32_8 : i32
    %10 = arith.extui %9 : i1 to i32
    %c0_i32_9 = arith.constant 0 : i32
    %11 = arith.cmpi ne, %10, %c0_i32_9 : i32
    scf.if %11 {
      %c0_10 = arith.constant 0 : index
      %c0_11 = arith.constant 0 : index
      %12 = vector.load %arg9[%c0_10, %c0_11] : memref<168x128xf32, #tpu.memory_space<vmem>>, vector<168x128xf32>
      %c0_12 = arith.constant 0 : index
      %c0_13 = arith.constant 0 : index
      %13 = vector.load %arg5[%c0_12, %c0_13] : memref<1x128xf32, #tpu.memory_space<vmem>>, vector<1x128xf32>
      %14 = vector.broadcast %13 : vector<1x128xf32> to vector<168x128xf32>
      %15 = arith.addf %12, %14 : vector<168x128xf32>
      %cst_14 = arith.constant dense<0.000000e+00> : vector<128xf32>
      %16 = vector.multi_reduction <add>, %15, %cst_14 [0] : vector<168x128xf32> to vector<128xf32>
      %17 = vector.shape_cast %16 : vector<128xf32> to vector<1x128xf32>
      %18 = arith.mulf %15, %15 : vector<168x128xf32>
      %cst_15 = arith.constant dense<0.000000e+00> : vector<128xf32>
      %19 = vector.multi_reduction <add>, %18, %cst_15 [0] : vector<168x128xf32> to vector<128xf32>
      %20 = vector.shape_cast %19 : vector<128xf32> to vector<1x128xf32>
      %21 = vector.shape_cast %17 : vector<1x128xf32> to vector<1x128xf32>
      %22 = vector.broadcast %21 : vector<1x128xf32> to vector<8x128xf32>
      %23 = vector.shape_cast %22 : vector<8x128xf32> to vector<1x8x128xf32>
      %c0_16 = arith.constant 0 : index
      %c0_17 = arith.constant 0 : index
      %c0_18 = arith.constant 0 : index
      %24 = vector.load %arg7[%c0_16, %c0_17, %c0_18] : memref<1x8x128xf32, #tpu.memory_space<vmem>>, vector<1x8x128xf32>
      tpu.vector_store %arg7[%c0_16, %c0_17, %c0_18], %23 {strides = array<i32>} : memref<1x8x128xf32, #tpu.memory_space<vmem>>, vector<1x8x128xf32>,
      %25 = vector.shape_cast %20 : vector<1x128xf32> to vector<1x128xf32>
      %26 = vector.broadcast %25 : vector<1x128xf32> to vector<8x128xf32>
      %27 = vector.shape_cast %26 : vector<8x128xf32> to vector<1x8x128xf32>
      %c0_19 = arith.constant 0 : index
      %c0_20 = arith.constant 0 : index
      %c0_21 = arith.constant 0 : index
      %28 = vector.load %arg8[%c0_19, %c0_20, %c0_21] : memref<1x8x128xf32, #tpu.memory_space<vmem>>, vector<1x8x128xf32>
      tpu.vector_store %arg8[%c0_19, %c0_20, %c0_21], %27 {strides = array<i32>} : memref<1x8x128xf32, #tpu.memory_space<vmem>>, vector<1x8x128xf32>,
      %cst_22 = arith.constant 0.000000e+00 : f32
      %29 = vector.broadcast %cst_22 : f32 to vector<168x128xf32>
      %30 = arith.cmpf oge, %15, %29 : vector<168x128xf32>
      %cst_23 = arith.constant 2.000000e-01 : f32
      %31 = vector.broadcast %cst_23 : f32 to vector<168x128xf32>
      %32 = arith.mulf %31, %15 : vector<168x128xf32>
      %33 = arith.select %30, %15, %32 : vector<168x128xi1>, vector<168x128xf32>
      %34 = arith.truncf %33 : vector<168x128xf32> to vector<168x128xbf16>
      %c0_24 = arith.constant 0 : index
      %c0_25 = arith.constant 0 : index
      %35 = vector.load %arg6[%c0_24, %c0_25] : memref<168x128xbf16, #tpu.memory_space<vmem>>, vector<168x128xbf16>
      tpu.vector_store %arg6[%c0_24, %c0_25], %34 {strides = array<i32>} : memref<168x128xbf16, #tpu.memory_space<vmem>>, vector<168x128xbf16>,
    } else {
    }
    return
  }
  func.func @transform_0(%arg0: i32, %arg1: i32, %arg2: i32) -> (i32, i32) {
    %c0_i32 = arith.constant 0 : i32
    return %arg0, %arg2 : i32, i32
  }
  func.func @transform_1(%arg0: i32, %arg1: i32, %arg2: i32) -> (i32, i32) {
    %c0_i32 = arith.constant 0 : i32
    return %arg2, %arg1 : i32, i32
  }
  func.func @transform_2(%arg0: i32, %arg1: i32, %arg2: i32) -> (i32, i32) {
    %c0_i32 = arith.constant 0 : i32
    %c0_i32_0 = arith.constant 0 : i32
    return %c0_i32, %arg1 : i32, i32
  }
  func.func @transform_3(%arg0: i32, %arg1: i32, %arg2: i32) -> (i32, i32) {
    %c0_i32 = arith.constant 0 : i32
    return %arg0, %arg1 : i32, i32
  }
  func.func @transform_4(%arg0: i32, %arg1: i32, %arg2: i32) -> (i32, i32, i32) {
    %c0_i32 = arith.constant 0 : i32
    %c0_i32_0 = arith.constant 0 : i32
    return %arg0, %c0_i32, %arg1 : i32, i32, i32
  }
  func.func @transform_5(%arg0: i32, %arg1: i32, %arg2: i32) -> (i32, i32, i32) {
    %c0_i32 = arith.constant 0 : i32
    %c0_i32_0 = arith.constant 0 : i32
    return %arg0, %c0_i32, %arg1 : i32, i32, i32
  }
}

</mosaic_0001>

<llo_original>
// kernel: tpu_custom_call.1
$region0: #{tpu_custom_call.1}
  #allocation0 [shape = 'u32[]', space=smem, size = 0x4, offset = 0x4, fixed_abs, tag = 'smem constant byte address 0x4 - core index']
  #allocation1 [shape = 'u32[144,128]{1,0:T(1,128)}', space=vmem, size = 0x12000, scoped, tag = 'internal scratch']
  #allocation2 [shape = 'f32[168,128]{1,0:T(8,128)}', space=vmem, size = 0x15000, scoped, tag = 'scratch operand']
  %s0 = inlined_call_operand.hbm [shape: bf16[168,128], index: 0, kind: input, shape index: {}]
  %s1 = inlined_call_operand.hbm [shape: bf16[128,128], index: 1, kind: input, shape index: {}]
  %s2 = inlined_call_operand.vmem [shape: f32[1,128], index: 2, kind: input, shape index: {}]
  %s3 = inlined_call_operand.hbm [shape: bf16[168,128], index: 3, kind: output, shape index: {0}]
  %s4 = inlined_call_operand.hbm [shape: f32[1,8,128], index: 4, kind: output, shape index: {1}]
  %s5 = inlined_call_operand.hbm [shape: f32[1,8,128], index: 5, kind: output, shape index: {2}]
  %6 = xla_tuple %s3, %s4, %s5
  %s7 = sld [smem:[#allocation0]]
  $region54: #{tpu_custom_call.1} parent=0
    _
  %s9 = ssub.s32 1, %s7
  %s10 = scalar_select 0, %s9, %s7
  $region1: #{tpu_custom_call.1} parent=0
    #allocation3 [shape = 'u8[43008]{0}', space=vmem, size = 0xa800, scoped, tag = 'input window, operand 0, single buffered']
    #allocation4 [shape = 's32[1]{0}', space=sflag, size = 0x4, scoped, tag = 'scoped memory for tpu_custom_call.1']
    #allocation5 [shape = 's32[1]{0}', space=sflag, size = 0x4, scoped, tag = 'scoped memory for tpu_custom_call.1']
    #allocation6 [shape = 'u8[32768]{0}', space=vmem, size = 0x8000, scoped, tag = 'input window, operand 1, single buffered']
    #allocation7 [shape = 's32[1]{0}', space=sflag, size = 0x4, scoped, tag = 'scoped memory for tpu_custom_call.1']
    #allocation8 [shape = 'u8[43008]{0}', space=vmem, size = 0xa800, scoped, tag = 'output window, operand 0, single buffered']
    #allocation9 [shape = 'u8[4096]{0}', space=vmem, size = 0x1000, scoped, tag = 'output window, operand 1, single buffered']
    #allocation10 [shape = 's32[1]{0}', space=sflag, size = 0x4, scoped, tag = 'scoped memory for tpu_custom_call.1']
    #allocation11 [shape = 'u8[4096]{0}', space=vmem, size = 0x1000, scoped, tag = 'output window, operand 2, single buffered']
    %11 = vsyncpa [#allocation4], 0
    %12 = vsyncpa [#allocation7], 0
    %13 = vsyncpa [#allocation5], 0
    %14 = vsyncpa [#allocation10], 0
    // Predicated region
    $region2: #{tpu_custom_call.1} parent=1 // pred_check
      _
    $region3: #{tpu_custom_call.1} parent=1 // pred_check_branch
      %16 = sbr.rel (0) target = $region5
    $region4: #{tpu_custom_call.1} parent=1 // pred_region
      %s18 = ssub.s32 1344, 1344
      %19 = vsyncadd [#allocation4], %s18
      %s20 = sshll.u32 [#allocation3], 4
      %s21 = int_to_ptr.vmem [resolvable:$true] %s20
      %26 = dma.hbm_to_vmem [thread:$0]  %s0, 1344, %s21, [#allocation4], 64, 64, 4
    $region5: #{tpu_custom_call.1} parent=1 // pred_fallthru
      _
    // Predicated region
    $region6: #{tpu_custom_call.1} parent=1 // pred_check
      _
    $region7: #{tpu_custom_call.1} parent=1 // pred_check_branch
      %28 = sbr.rel (0) target = $region9
    $region8: #{tpu_custom_call.1} parent=1 // pred_region
      %s30 = ssub.s32 1024, 1024
      %31 = vsyncadd [#allocation7], %s30
      %s32 = sshll.u32 [#allocation6], 4
      %s33 = int_to_ptr.vmem [resolvable:$true] %s32
      %38 = dma.hbm_to_vmem [thread:$0]  %s1, 1024, %s33, [#allocation7], 64, 64, 4
    $region9: #{tpu_custom_call.1} parent=1 // pred_fallthru
      _
    // Predicated region
    $region10: #{tpu_custom_call.1} parent=1 // pred_check
      _
    $region11: #{tpu_custom_call.1} parent=1 // pred_check_branch
      %40 = sbr.rel (0) target = $region13
    $region12: #{tpu_custom_call.1} parent=1 // pred_region
      _
    $region13: #{tpu_custom_call.1} parent=1 // pred_fallthru
      _
    // Predicated region
    $region14: #{tpu_custom_call.1} parent=1 // pred_check
      _
    $region15: #{tpu_custom_call.1} parent=1 // pred_check_branch
      %42 = sbr.rel (0) target = $region17
    $region16: #{tpu_custom_call.1} parent=1 // pred_region
      %43 = dma.done [#allocation4], 1344
    $region17: #{tpu_custom_call.1} parent=1 // pred_fallthru
      _
    // Predicated region
    $region18: #{tpu_custom_call.1} parent=1 // pred_check
      _
    $region19: #{tpu_custom_call.1} parent=1 // pred_check_branch
      %45 = sbr.rel (0) target = $region21
    $region20: #{tpu_custom_call.1} parent=1 // pred_region
      %46 = dma.done [#allocation7], 1024
    $region21: #{tpu_custom_call.1} parent=1 // pred_fallthru
      _
    %p48 = scmp.eq.s32.totalorder 0, 0
    // Predicated region
    $region22: #{tpu_custom_call.1} parent=1 // pred_check
      %p49 = pneg %p48
    $region23: #{tpu_custom_call.1} parent=1 // pred_check_branch
      %51 = sbr.rel (%p49) target = $region25
    $region24: #{tpu_custom_call.1} parent=1 // pred_region
      %52 = vst [vmem:[#allocation2] sm:$0xff] 0.0
      %53 = vst [vmem:[#allocation2 + $0x8] sm:$0xff] 0.0
      %54 = vst [vmem:[#allocation2 + $0x10] sm:$0xff] 0.0
      %55 = vst [vmem:[#allocation2 + $0x18] sm:$0xff] 0.0
      %56 = vst [vmem:[#allocation2 + $0x20] sm:$0xff] 0.0
      %57 = vst [vmem:[#allocation2 + $0x28] sm:$0xff] 0.0
      %58 = vst [vmem:[#allocation2 + $0x30] sm:$0xff] 0.0
      %59 = vst [vmem:[#allocation2 + $0x38] sm:$0xff] 0.0
      %60 = vst [vmem:[#allocation2 + $0x40] sm:$0xff] 0.0
      %61 = vst [vmem:[#allocation2 + $0x48] sm:$0xff] 0.0
      %62 = vst [vmem:[#allocation2 + $0x50] sm:$0xff] 0.0
      %63 = vst [vmem:[#allocation2 + $0x58] sm:$0xff] 0.0
      %64 = vst [vmem:[#allocation2 + $0x60] sm:$0xff] 0.0
      %65 = vst [vmem:[#allocation2 + $0x68] sm:$0xff] 0.0
      %66 = vst [vmem:[#allocation2 + $0x70] sm:$0xff] 0.0
      %67 = vst [vmem:[#allocation2 + $0x78] sm:$0xff] 0.0
      %68 = vst [vmem:[#allocation2 + $0x80] sm:$0xff] 0.0
      %69 = vst [vmem:[#allocation2 + $0x88] sm:$0xff] 0.0
      %70 = vst [vmem:[#allocation2 + $0x90] sm:$0xff] 0.0
      %71 = vst [vmem:[#allocation2 + $0x98] sm:$0xff] 0.0
      %72 = vst [vmem:[#allocation2 + $0xa0] sm:$0xff] 0.0
    $region25: #{tpu_custom_call.1} parent=1 // pred_fallthru
      _
    %v73 = vld [vmem:[#allocation2] sm:$0xff]
    %v74 = vld [vmem:[#allocation2 + $0x8] sm:$0xff]
    %v75 = vld [vmem:[#allocation2 + $0x10] sm:$0xff]
    %v76 = vld [vmem:[#allocation2 + $0x18] sm:$0xff]
    %v77 = vld [vmem:[#allocation2 + $0x20] sm:$0xff]
    %v78 = vld [vmem:[#allocation2 + $0x28] sm:$0xff]
    %v79 = vld [vmem:[#allocation2 + $0x30] sm:$0xff]
    %v80 = vld [vmem:[#allocation2 + $0x38] sm:$0xff]
    %v81 = vld [vmem:[#allocation2 + $0x40] sm:$0xff]
    %v82 = vld [vmem:[#allocation2 + $0x48] sm:$0xff]
    %v83 = vld [vmem:[#allocation2 + $0x50] sm:$0xff]
    %v84 = vld [vmem:[#allocation2 + $0x58] sm:$0xff]
    %v85 = vld [vmem:[#allocation2 + $0x60] sm:$0xff]
    %v86 = vld [vmem:[#allocation2 + $0x68] sm:$0xff]
    %v87 = vld [vmem:[#allocation2 + $0x70] sm:$0xff]
    %v88 = vld [vmem:[#allocation2 + $0x78] sm:$0xff]
    %v89 = vld [vmem:[#allocation2 + $0x80] sm:$0xff]
    %v90 = vld [vmem:[#allocation2 + $0x88] sm:$0xff]
    %v91 = vld [vmem:[#allocation2 + $0x90] sm:$0xff]
    %v92 = vld [vmem:[#allocation2 + $0x98] sm:$0xff]
    %v93 = vld [vmem:[#allocation2 + $0xa0] sm:$0xff]
    %v94 = vld [vmem:[#allocation3] sm:$0xf]
    %v95 = vld [vmem:[#allocation3 + $0x4] sm:$0xf]
    %v96 = vld [vmem:[#allocation3 + $0x8] sm:$0xf]
    %v97 = vld [vmem:[#allocation3 + $0xc] sm:$0xf]
    %v98 = vld [vmem:[#allocation3 + $0x10] sm:$0xf]
    %v99 = vld [vmem:[#allocation3 + $0x14] sm:$0xf]
    %v100 = vld [vmem:[#allocation3 + $0x18] sm:$0xf]
    %v101 = vld [vmem:[#allocation3 + $0x1c] sm:$0xf]
    %v102 = vld [vmem:[#allocation3 + $0x20] sm:$0xf]
    %v103 = vld [vmem:[#allocation3 + $0x24] sm:$0xf]
    %v104 = vld [vmem:[#allocation3 + $0x28] sm:$0xf]
    %v105 = vld [vmem:[#allocation3 + $0x2c] sm:$0xf]
    %v106 = vld [vmem:[#allocation3 + $0x30] sm:$0xf]
    %v107 = vld [vmem:[#allocation3 + $0x34] sm:$0xf]
    %v108 = vld [vmem:[#allocation3 + $0x38] sm:$0xf]
    %v109 = vld [vmem:[#allocation3 + $0x3c] sm:$0xf]
    %v110 = vld [vmem:[#allocation3 + $0x40] sm:$0xf]
    %v111 = vld [vmem:[#allocation3 + $0x44] sm:$0xf]
    %v112 = vld [vmem:[#allocation3 + $0x48] sm:$0xf]
    %v113 = vld [vmem:[#allocation3 + $0x4c] sm:$0xf]
    %v114 = vld [vmem:[#allocation3 + $0x50] sm:$0xf]
    %v115 = vld [vmem:[#allocation6] sm:$0xf]
    %v116 = vld [vmem:[#allocation6 + $0x4] sm:$0xf]
    %v117 = vld [vmem:[#allocation6 + $0x8] sm:$0xf]
    %v118 = vld [vmem:[#allocation6 + $0xc] sm:$0xf]
    %v119 = vld [vmem:[#allocation6 + $0x10] sm:$0xf]
    %v120 = vld [vmem:[#allocation6 + $0x14] sm:$0xf]
    %v121 = vld [vmem:[#allocation6 + $0x18] sm:$0xf]
    %v122 = vld [vmem:[#allocation6 + $0x1c] sm:$0xf]
    %v123 = vld [vmem:[#allocation6 + $0x20] sm:$0xf]
    %v124 = vld [vmem:[#allocation6 + $0x24] sm:$0xf]
    %v125 = vld [vmem:[#allocation6 + $0x28] sm:$0xf]
    %v126 = vld [vmem:[#allocation6 + $0x2c] sm:$0xf]
    %v127 = vld [vmem:[#allocation6 + $0x30] sm:$0xf]
    %v128 = vld [vmem:[#allocation6 + $0x34] sm:$0xf]
    %v129 = vld [vmem:[#allocation6 + $0x38] sm:$0xf]
    %v130 = vld [vmem:[#allocation6 + $0x3c] sm:$0xf]
    %v152 = vunpack.c.l.b16 %v94
    %v153 = vunpack.c.l.b16 %v95
    %v154 = vunpack.c.l.b16 %v96
    %v155 = vunpack.c.l.b16 %v97
    %v156 = vunpack.c.l.b16 %v98
    %v157 = vunpack.c.l.b16 %v99
    %v158 = vunpack.c.l.b16 %v100
    %v159 = vunpack.c.l.b16 %v101
    %v160 = vunpack.c.l.b16 %v102
    %v161 = vunpack.c.l.b16 %v103
    %v162 = vunpack.c.l.b16 %v104
    %v163 = vunpack.c.l.b16 %v105
    %v164 = vunpack.c.l.b16 %v106
    %v165 = vunpack.c.l.b16 %v107
    %v166 = vunpack.c.l.b16 %v108
    %v167 = vunpack.c.l.b16 %v109
    %v168 = vunpack.c.l.b16 %v110
    %v169 = vunpack.c.l.b16 %v111
    %v170 = vunpack.c.l.b16 %v112
    %v171 = vunpack.c.l.b16 %v113
    %v172 = vunpack.c.l.b16 %v114
    %v173 = vpack.c.b16 %v153, %v152
    %v174 = vpack.c.b16 %v155, %v154
    %v175 = vpack.c.b16 %v157, %v156
    %v176 = vpack.c.b16 %v159, %v158
    %v177 = vpack.c.b16 %v161, %v160
    %v178 = vpack.c.b16 %v163, %v162
    %v179 = vpack.c.b16 %v165, %v164
    %v180 = vpack.c.b16 %v167, %v166
    %v181 = vpack.c.b16 %v169, %v168
    %v182 = vpack.c.b16 %v171, %v170
    %v183 = vpack.c.b16 %v172, %v172
    %v211 = vunpack.c.l.b16 %v115
    %v212 = vunpack.c.l.b16 %v116
    %v213 = vunpack.c.l.b16 %v117
    %v214 = vunpack.c.l.b16 %v118
    %v215 = vunpack.c.l.b16 %v119
    %v216 = vunpack.c.l.b16 %v120
    %v217 = vunpack.c.l.b16 %v121
    %v218 = vunpack.c.l.b16 %v122
    %v219 = vunpack.c.l.b16 %v123
    %v220 = vunpack.c.l.b16 %v124
    %v221 = vunpack.c.l.b16 %v125
    %v222 = vunpack.c.l.b16 %v126
    %v223 = vunpack.c.l.b16 %v127
    %v224 = vunpack.c.l.b16 %v128
    %v225 = vunpack.c.l.b16 %v129
    %v226 = vunpack.c.l.b16 %v130
    %v227 = vpack.c.b16 %v212, %v211
    %v228 = vpack.c.b16 %v214, %v213
    %v229 = vpack.c.b16 %v216, %v215
    %v230 = vpack.c.b16 %v218, %v217
    %v231 = vpack.c.b16 %v220, %v219
    %v232 = vpack.c.b16 %v222, %v221
    %v233 = vpack.c.b16 %v224, %v223
    %v234 = vpack.c.b16 %v226, %v225
    %243 = vmatprep.subr.bf16.mxu0 0
    %244 = vmatpush1.bf16.msra.mxu0 %v234
    %245 = vmatprep.subr.bf16.mxu0 0
    %246 = vmatpush1.bf16.msra.mxu0 %v233
    %247 = vmatprep.subr.bf16.mxu0 0
    %248 = vmatpush1.bf16.msra.mxu0 %v232
    %249 = vmatprep.subr.bf16.mxu0 0
    %250 = vmatpush1.bf16.msra.mxu0 %v231
    %251 = vmatprep.subr.bf16.mxu0 0
    %252 = vmatpush1.bf16.msra.mxu0 %v230
    %253 = vmatprep.subr.bf16.mxu0 0
    %254 = vmatpush1.bf16.msra.mxu0 %v229
    %255 = vmatprep.subr.bf16.mxu0 0
    %256 = vmatpush1.bf16.msra.mxu0 %v228
    %257 = vmatprep.subr.bf16.mxu0 0
    %258 = vmatpush1.bf16.msra.mxu0 %v227
    %259 = vmatprep.subr.bf16.mxu0 0
    %260 = vmatpush2.bf16.msra.mxu0 0
    %261 = vmatprep.subr.bf16.mxu0 0
    %262 = vmatpush2.bf16.msra.mxu0 0
    %263 = vmatprep.subr.bf16.mxu0 0
    %264 = vmatpush2.bf16.msra.mxu0 0
    %265 = vmatprep.subr.bf16.mxu0 0
    %266 = vmatpush2.bf16.msra.mxu0 0
    %267 = vmatprep.subr.bf16.mxu0 0
    %268 = vmatpush2.bf16.msra.mxu0 0
    %269 = vmatprep.subr.bf16.mxu0 0
    %270 = vmatpush2.bf16.msra.mxu0 0
    %271 = vmatprep.subr.bf16.mxu0 0
    %272 = vmatpush2.bf16.msra.mxu0 0
    %273 = vmatprep.subr.bf16.mxu0 0
    %274 = vmatpush2.bf16.msra.mxu0 0
    %275 = vmatprep.mubr.bf16.mxu0 0
    %276 = vmatmul.mubr.bf16.gmra.mxu0 %v173
    %v277 = vpop.f32.mrf.mxu0
    %v278 = vadd.f32 0.0, %v277
    %v279 = vpop.f32.mrf.mxu0
    %v280 = vpop.f32.mrf.mxu0
    %v281 = vadd.f32 0.0, %v280
    %v282 = vpop.f32.mrf.mxu0
    %283 = vmatprep.mubr.bf16.mxu0 0
    %284 = vmatmul.mubr.bf16.gmra.mxu0 %v174
    %v285 = vpop.f32.mrf.mxu0
    %v286 = vadd.f32 0.0, %v285
    %v287 = vpop.f32.mrf.mxu0
    %v288 = vpop.f32.mrf.mxu0
    %v289 = vadd.f32 0.0, %v288
    %v290 = vpop.f32.mrf.mxu0
    %291 = vmatprep.mubr.bf16.mxu0 0
    %292 = vmatmul.mubr.bf16.gmra.mxu0 %v175
    %v293 = vpop.f32.mrf.mxu0
    %v294 = vadd.f32 0.0, %v293
    %v295 = vpop.f32.mrf.mxu0
    %v296 = vpop.f32.mrf.mxu0
    %v297 = vadd.f32 0.0, %v296
    %v298 = vpop.f32.mrf.mxu0
    %299 = vmatprep.mubr.bf16.mxu0 0
    %300 = vmatmul.mubr.bf16.gmra.mxu0 %v176
    %v301 = vpop.f32.mrf.mxu0
    %v302 = vadd.f32 0.0, %v301
    %v303 = vpop.f32.mrf.mxu0
    %v304 = vpop.f32.mrf.mxu0
    %v305 = vadd.f32 0.0, %v304
    %v306 = vpop.f32.mrf.mxu0
    %307 = vmatprep.mubr.bf16.mxu0 0
    %308 = vmatmul.mubr.bf16.gmra.mxu0 %v177
    %v309 = vpop.f32.mrf.mxu0
    %v310 = vadd.f32 0.0, %v309
    %v311 = vpop.f32.mrf.mxu0
    %v312 = vpop.f32.mrf.mxu0
    %v313 = vadd.f32 0.0, %v312
    %v314 = vpop.f32.mrf.mxu0
    %315 = vmatprep.mubr.bf16.mxu0 0
    %316 = vmatmul.mubr.bf16.gmra.mxu0 %v178
    %v317 = vpop.f32.mrf.mxu0
    %v318 = vadd.f32 0.0, %v317
    %v319 = vpop.f32.mrf.mxu0
    %v320 = vpop.f32.mrf.mxu0
    %v321 = vadd.f32 0.0, %v320
    %v322 = vpop.f32.mrf.mxu0
    %323 = vmatprep.mubr.bf16.mxu0 0
    %324 = vmatmul.mubr.bf16.gmra.mxu0 %v179
    %v325 = vpop.f32.mrf.mxu0
    %v326 = vadd.f32 0.0, %v325
    %v327 = vpop.f32.mrf.mxu0
    %v328 = vpop.f32.mrf.mxu0
    %v329 = vadd.f32 0.0, %v328
    %v330 = vpop.f32.mrf.mxu0
    %331 = vmatprep.mubr.bf16.mxu0 0
    %332 = vmatmul.mubr.bf16.gmra.mxu0 %v180
    %v333 = vpop.f32.mrf.mxu0
    %v334 = vadd.f32 0.0, %v333
    %v335 = vpop.f32.mrf.mxu0
    %v336 = vpop.f32.mrf.mxu0
    %v337 = vadd.f32 0.0, %v336
    %v338 = vpop.f32.mrf.mxu0
    %339 = vmatprep.mubr.bf16.mxu0 0
    %340 = vmatmul.mubr.bf16.gmra.mxu0 %v181
    %v341 = vpop.f32.mrf.mxu0
    %v342 = vadd.f32 0.0, %v341
    %v343 = vpop.f32.mrf.mxu0
    %v344 = vpop.f32.mrf.mxu0
    %v345 = vadd.f32 0.0, %v344
    %v346 = vpop.f32.mrf.mxu0
    %347 = vmatprep.mubr.bf16.mxu0 0
    %348 = vmatmul.mubr.bf16.gmra.mxu0 %v182
    %v349 = vpop.f32.mrf.mxu0
    %v350 = vadd.f32 0.0, %v349
    %v351 = vpop.f32.mrf.mxu0
    %v352 = vpop.f32.mrf.mxu0
    %v353 = vadd.f32 0.0, %v352
    %v354 = vpop.f32.mrf.mxu0
    %355 = vmatprep.mubr.bf16.mxu0 0
    %356 = vmatmul.mubr.bf16.gmra.mxu0 %v183
    %v357 = vpop.f32.mrf.mxu0
    %v358 = vadd.f32 0.0, %v357
    %v359 = vpop.f32.mrf.mxu0
    %v360 = vpop.f32.mrf.mxu0
    %v361 = vpop.f32.mrf.mxu0
    %362 = vdwg.mxu0
    %v363 = vadd.f32 %v73, %v278
    %v364 = vadd.f32 %v74, %v281
    %v365 = vadd.f32 %v75, %v286
    %v366 = vadd.f32 %v76, %v289
    %v367 = vadd.f32 %v77, %v294
    %v368 = vadd.f32 %v78, %v297
    %v369 = vadd.f32 %v79, %v302
    %v370 = vadd.f32 %v80, %v305
    %v371 = vadd.f32 %v81, %v310
    %v372 = vadd.f32 %v82, %v313
    %v373 = vadd.f32 %v83, %v318
    %v374 = vadd.f32 %v84, %v321
    %v375 = vadd.f32 %v85, %v326
    %v376 = vadd.f32 %v86, %v329
    %v377 = vadd.f32 %v87, %v334
    %v378 = vadd.f32 %v88, %v337
    %v379 = vadd.f32 %v89, %v342
    %v380 = vadd.f32 %v90, %v345
    %v381 = vadd.f32 %v91, %v350
    %v382 = vadd.f32 %v92, %v353
    %v383 = vadd.f32 %v93, %v358
    %384 = vst [vmem:[#allocation2] sm:$0xff] %v363
    %385 = vst [vmem:[#allocation2 + $0x8] sm:$0xff] %v364
    %386 = vst [vmem:[#allocation2 + $0x10] sm:$0xff] %v365
    %387 = vst [vmem:[#allocation2 + $0x18] sm:$0xff] %v366
    %388 = vst [vmem:[#allocation2 + $0x20] sm:$0xff] %v367
    %389 = vst [vmem:[#allocation2 + $0x28] sm:$0xff] %v368
    %390 = vst [vmem:[#allocation2 + $0x30] sm:$0xff] %v369
    %391 = vst [vmem:[#allocation2 + $0x38] sm:$0xff] %v370
    %392 = vst [vmem:[#allocation2 + $0x40] sm:$0xff] %v371
    %393 = vst [vmem:[#allocation2 + $0x48] sm:$0xff] %v372
    %394 = vst [vmem:[#allocation2 + $0x50] sm:$0xff] %v373
    %395 = vst [vmem:[#allocation2 + $0x58] sm:$0xff] %v374
    %396 = vst [vmem:[#allocation2 + $0x60] sm:$0xff] %v375
    %397 = vst [vmem:[#allocation2 + $0x68] sm:$0xff] %v376
    %398 = vst [vmem:[#allocation2 + $0x70] sm:$0xff] %v377
    %399 = vst [vmem:[#allocation2 + $0x78] sm:$0xff] %v378
    %400 = vst [vmem:[#allocation2 + $0x80] sm:$0xff] %v379
    %401 = vst [vmem:[#allocation2 + $0x88] sm:$0xff] %v380
    %402 = vst [vmem:[#allocation2 + $0x90] sm:$0xff] %v381
    %403 = vst [vmem:[#allocation2 + $0x98] sm:$0xff] %v382
    %404 = vst [vmem:[#allocation2 + $0xa0] sm:$0xff] %v383
    // Predicated region
    $region26: #{tpu_custom_call.1} parent=1 // pred_check
      %p405 = pneg %p48
    $region27: #{tpu_custom_call.1} parent=1 // pred_check_branch
      %407 = sbr.rel (%p405) target = $region29
    $region28: #{tpu_custom_call.1} parent=1 // pred_region
      %v408 = vld [vmem:[#allocation2] sm:$0xff]
      %v409 = vld [vmem:[#allocation2 + $0x8] sm:$0xff]
      %v410 = vld [vmem:[#allocation2 + $0x10] sm:$0xff]
      %v411 = vld [vmem:[#allocation2 + $0x18] sm:$0xff]
      %v412 = vld [vmem:[#allocation2 + $0x20] sm:$0xff]
      %v413 = vld [vmem:[#allocation2 + $0x28] sm:$0xff]
      %v414 = vld [vmem:[#allocation2 + $0x30] sm:$0xff]
      %v415 = vld [vmem:[#allocation2 + $0x38] sm:$0xff]
      %v416 = vld [vmem:[#allocation2 + $0x40] sm:$0xff]
      %v417 = vld [vmem:[#allocation2 + $0x48] sm:$0xff]
      %v418 = vld [vmem:[#allocation2 + $0x50] sm:$0xff]
      %v419 = vld [vmem:[#allocation2 + $0x58] sm:$0xff]
      %v420 = vld [vmem:[#allocation2 + $0x60] sm:$0xff]
      %v421 = vld [vmem:[#allocation2 + $0x68] sm:$0xff]
      %v422 = vld [vmem:[#allocation2 + $0x70] sm:$0xff]
      %v423 = vld [vmem:[#allocation2 + $0x78] sm:$0xff]
      %v424 = vld [vmem:[#allocation2 + $0x80] sm:$0xff]
      %v425 = vld [vmem:[#allocation2 + $0x88] sm:$0xff]
      %v426 = vld [vmem:[#allocation2 + $0x90] sm:$0xff]
      %v427 = vld [vmem:[#allocation2 + $0x98] sm:$0xff]
      %v428 = vld [vmem:[#allocation2 + $0xa0] sm:$0xff]
      %v429 = vld [vmem:[%s2] sm:$0x1]
      %v431 = vlaneseq
      %v432 = vshrl.u32 %v431, 7
      %v433 = vsub.s32 0, %v432
      %v434 = vrot.slane %v429, %v433
      %v436 = vadd.f32 %v408, %v434
      %v437 = vadd.f32 %v409, %v434
      %v438 = vadd.f32 %v410, %v434
      %v439 = vadd.f32 %v411, %v434
      %v440 = vadd.f32 %v412, %v434
      %v441 = vadd.f32 %v413, %v434
      %v442 = vadd.f32 %v414, %v434
      %v443 = vadd.f32 %v415, %v434
      %v444 = vadd.f32 %v416, %v434
      %v445 = vadd.f32 %v417, %v434
      %v446 = vadd.f32 %v418, %v434
      %v447 = vadd.f32 %v419, %v434
      %v448 = vadd.f32 %v420, %v434
      %v449 = vadd.f32 %v421, %v434
      %v450 = vadd.f32 %v422, %v434
      %v451 = vadd.f32 %v423, %v434
      %v452 = vadd.f32 %v424, %v434
      %v453 = vadd.f32 %v425, %v434
      %v454 = vadd.f32 %v426, %v434
      %v455 = vadd.f32 %v427, %v434
      %v456 = vadd.f32 %v428, %v434
      %v457 = vadd.f32 %v436, %v437
      %v458 = vadd.f32 %v457, %v438
      %v459 = vadd.f32 %v458, %v439
      %v460 = vadd.f32 %v459, %v440
      %v461 = vadd.f32 %v460, %v441
      %v462 = vadd.f32 %v461, %v442
      %v463 = vadd.f32 %v462, %v443
      %v464 = vadd.f32 %v463, %v444
      %v465 = vadd.f32 %v464, %v445
      %v466 = vadd.f32 %v465, %v446
      %v467 = vadd.f32 %v466, %v447
      %v468 = vadd.f32 %v467, %v448
      %v469 = vadd.f32 %v468, %v449
      %v470 = vadd.f32 %v469, %v450
      %v471 = vadd.f32 %v470, %v451
      %v472 = vadd.f32 %v471, %v452
      %v473 = vadd.f32 %v472, %v453
      %v474 = vadd.f32 %v473, %v454
      %v475 = vadd.f32 %v474, %v455
      %v476 = vadd.f32 %v475, %v456
      %v477 = vrot.slane %v476, 4
      %v478 = vadd.f32 %v476, %v477
      %v479 = vrot.slane %v478, 2
      %v480 = vadd.f32 %v478, %v479
      %v481 = vrot.slane %v480, 1
      %v482 = vadd.f32 %v480, %v481
      %v483 = vmul.f32 %v436, %v436
      %v484 = vmul.f32 %v437, %v437
      %v485 = vmul.f32 %v438, %v438
      %v486 = vmul.f32 %v439, %v439
      %v487 = vmul.f32 %v440, %v440
      %v488 = vmul.f32 %v441, %v441
      %v489 = vmul.f32 %v442, %v442
      %v490 = vmul.f32 %v443, %v443
      %v491 = vmul.f32 %v444, %v444
      %v492 = vmul.f32 %v445, %v445
      %v493 = vmul.f32 %v446, %v446
      %v494 = vmul.f32 %v447, %v447
      %v495 = vmul.f32 %v448, %v448
      %v496 = vmul.f32 %v449, %v449
      %v497 = vmul.f32 %v450, %v450
      %v498 = vmul.f32 %v451, %v451
      %v499 = vmul.f32 %v452, %v452
      %v500 = vmul.f32 %v453, %v453
      %v501 = vmul.f32 %v454, %v454
      %v502 = vmul.f32 %v455, %v455
      %v503 = vmul.f32 %v456, %v456
      %v504 = vadd.f32 %v483, %v484
      %v505 = vadd.f32 %v504, %v485
      %v506 = vadd.f32 %v505, %v486
      %v507 = vadd.f32 %v506, %v487
      %v508 = vadd.f32 %v507, %v488
      %v509 = vadd.f32 %v508, %v489
      %v510 = vadd.f32 %v509, %v490
      %v511 = vadd.f32 %v510, %v491
      %v512 = vadd.f32 %v511, %v492
      %v513 = vadd.f32 %v512, %v493
      %v514 = vadd.f32 %v513, %v494
      %v515 = vadd.f32 %v514, %v495
      %v516 = vadd.f32 %v515, %v496
      %v517 = vadd.f32 %v516, %v497
      %v518 = vadd.f32 %v517, %v498
      %v519 = vadd.f32 %v518, %v499
      %v520 = vadd.f32 %v519, %v500
      %v521 = vadd.f32 %v520, %v501
      %v522 = vadd.f32 %v521, %v502
      %v523 = vadd.f32 %v522, %v503
      %v524 = vrot.slane %v523, 4
      %v525 = vadd.f32 %v523, %v524
      %v526 = vrot.slane %v525, 2
      %v527 = vadd.f32 %v525, %v526
      %v528 = vrot.slane %v527, 1
      %v529 = vadd.f32 %v527, %v528
      %530 = vst [vmem:[#allocation9] sm:$0xff] %v482
      %531 = vst [vmem:[#allocation11] sm:$0xff] %v529
      %vm532 = vcmp.ge.f32.partialorder %v436, 0.0
      %vm533 = vcmp.ge.f32.partialorder %v437, 0.0
      %vm534 = vcmp.ge.f32.partialorder %v438, 0.0
      %vm535 = vcmp.ge.f32.partialorder %v439, 0.0
      %vm536 = vcmp.ge.f32.partialorder %v440, 0.0
      %vm537 = vcmp.ge.f32.partialorder %v441, 0.0
      %vm538 = vcmp.ge.f32.partialorder %v442, 0.0
      %vm539 = vcmp.ge.f32.partialorder %v443, 0.0
      %vm540 = vcmp.ge.f32.partialorder %v444, 0.0
      %vm541 = vcmp.ge.f32.partialorder %v445, 0.0
      %vm542 = vcmp.ge.f32.partialorder %v446, 0.0
      %vm543 = vcmp.ge.f32.partialorder %v447, 0.0
      %vm544 = vcmp.ge.f32.partialorder %v448, 0.0
      %vm545 = vcmp.ge.f32.partialorder %v449, 0.0
      %vm546 = vcmp.ge.f32.partialorder %v450, 0.0
      %vm547 = vcmp.ge.f32.partialorder %v451, 0.0
      %vm548 = vcmp.ge.f32.partialorder %v452, 0.0
      %vm549 = vcmp.ge.f32.partialorder %v453, 0.0
      %vm550 = vcmp.ge.f32.partialorder %v454, 0.0
      %vm551 = vcmp.ge.f32.partialorder %v455, 0.0
      %vm552 = vcmp.ge.f32.partialorder %v456, 0.0
      %v553 = vmul.f32 %v436, 0.2
      %v554 = vmul.f32 %v437, 0.2
      %v555 = vmul.f32 %v438, 0.2
      %v556 = vmul.f32 %v439, 0.2
      %v557 = vmul.f32 %v440, 0.2
      %v558 = vmul.f32 %v441, 0.2
      %v559 = vmul.f32 %v442, 0.2
      %v560 = vmul.f32 %v443, 0.2
      %v561 = vmul.f32 %v444, 0.2
      %v562 = vmul.f32 %v445, 0.2
      %v563 = vmul.f32 %v446, 0.2
      %v564 = vmul.f32 %v447, 0.2
      %v565 = vmul.f32 %v448, 0.2
      %v566 = vmul.f32 %v449, 0.2
      %v567 = vmul.f32 %v450, 0.2
      %v568 = vmul.f32 %v451, 0.2
      %v569 = vmul.f32 %v452, 0.2
      %v570 = vmul.f32 %v453, 0.2
      %v571 = vmul.f32 %v454, 0.2
      %v572 = vmul.f32 %v455, 0.2
      %v573 = vmul.f32 %v456, 0.2
      %v574 = vsel %vm532, %v436, %v553
      %v575 = vsel %vm533, %v437, %v554
      %v576 = vsel %vm534, %v438, %v555
      %v577 = vsel %vm535, %v439, %v556
      %v578 = vsel %vm536, %v440, %v557
      %v579 = vsel %vm537, %v441, %v558
      %v580 = vsel %vm538, %v442, %v559
      %v581 = vsel %vm539, %v443, %v560
      %v582 = vsel %vm540, %v444, %v561
      %v583 = vsel %vm541, %v445, %v562
      %v584 = vsel %vm542, %v446, %v563
      %v585 = vsel %vm543, %v447, %v564
      %v586 = vsel %vm544, %v448, %v565
      %v587 = vsel %vm545, %v449, %v566
      %v588 = vsel %vm546, %v450, %v567
      %v589 = vsel %vm547, %v451, %v568
      %v590 = vsel %vm548, %v452, %v569
      %v591 = vsel %vm549, %v453, %v570
      %v592 = vsel %vm550, %v454, %v571
      %v593 = vsel %vm551, %v455, %v572
      %v594 = vsel %vm552, %v456, %v573
      %v595 = vpack.c.bf16 %v575, %v574
      %v596 = vpack.c.bf16 %v577, %v576
      %v597 = vpack.c.bf16 %v579, %v578
      %v598 = vpack.c.bf16 %v581, %v580
      %v599 = vpack.c.bf16 %v583, %v582
      %v600 = vpack.c.bf16 %v585, %v584
      %v601 = vpack.c.bf16 %v587, %v586
      %v602 = vpack.c.bf16 %v589, %v588
      %v603 = vpack.c.bf16 %v591, %v590
      %v604 = vpack.c.bf16 %v593, %v592
      %v605 = vpack.c.bf16 %v594, %v594
      %v617 = vunpack.c.l.b16 %v595
      %v618 = vunpack.c.h.b16 %v595
      %v619 = vunpack.c.l.b16 %v596
      %v620 = vunpack.c.h.b16 %v596
      %v621 = vunpack.c.l.b16 %v597
      %v622 = vunpack.c.h.b16 %v597
      %v623 = vunpack.c.l.b16 %v598
      %v624 = vunpack.c.h.b16 %v598
      %v625 = vunpack.c.l.b16 %v599
      %v626 = vunpack.c.h.b16 %v599
      %v627 = vunpack.c.l.b16 %v600
      %v628 = vunpack.c.h.b16 %v600
      %v629 = vunpack.c.l.b16 %v601
      %v630 = vunpack.c.h.b16 %v601
      %v631 = vunpack.c.l.b16 %v602
      %v632 = vunpack.c.h.b16 %v602
      %v633 = vunpack.c.l.b16 %v603
      %v634 = vunpack.c.h.b16 %v603
      %v635 = vunpack.c.l.b16 %v604
      %v636 = vunpack.c.h.b16 %v604
      %v637 = vunpack.c.l.b16 %v605
      %v638 = vpack.c.b16 %v617, %v617
      %v639 = vpack.c.b16 %v618, %v618
      %v640 = vpack.c.b16 %v619, %v619
      %v641 = vpack.c.b16 %v620, %v620
      %v642 = vpack.c.b16 %v621, %v621
      %v643 = vpack.c.b16 %v622, %v622
      %v644 = vpack.c.b16 %v623, %v623
      %v645 = vpack.c.b16 %v624, %v624
      %v646 = vpack.c.b16 %v625, %v625
      %v647 = vpack.c.b16 %v626, %v626
      %v648 = vpack.c.b16 %v627, %v627
      %v649 = vpack.c.b16 %v628, %v628
      %v650 = vpack.c.b16 %v629, %v629
      %v651 = vpack.c.b16 %v630, %v630
      %v652 = vpack.c.b16 %v631, %v631
      %v653 = vpack.c.b16 %v632, %v632
      %v654 = vpack.c.b16 %v633, %v633
      %v655 = vpack.c.b16 %v634, %v634
      %v656 = vpack.c.b16 %v635, %v635
      %v657 = vpack.c.b16 %v636, %v636
      %v658 = vpack.c.b16 %v637, %v637
      %680 = vst [vmem:[#allocation8] sm:$0xf] %v638
      %681 = vst [vmem:[#allocation8 + $0x4] sm:$0xf] %v639
      %682 = vst [vmem:[#allocation8 + $0x8] sm:$0xf] %v640
      %683 = vst [vmem:[#allocation8 + $0xc] sm:$0xf] %v641
      %684 = vst [vmem:[#allocation8 + $0x10] sm:$0xf] %v642
      %685 = vst [vmem:[#allocation8 + $0x14] sm:$0xf] %v643
      %686 = vst [vmem:[#allocation8 + $0x18] sm:$0xf] %v644
      %687 = vst [vmem:[#allocation8 + $0x1c] sm:$0xf] %v645
      %688 = vst [vmem:[#allocation8 + $0x20] sm:$0xf] %v646
      %689 = vst [vmem:[#allocation8 + $0x24] sm:$0xf] %v647
      %690 = vst [vmem:[#allocation8 + $0x28] sm:$0xf] %v648
      %691 = vst [vmem:[#allocation8 + $0x2c] sm:$0xf] %v649
      %692 = vst [vmem:[#allocation8 + $0x30] sm:$0xf] %v650
      %693 = vst [vmem:[#allocation8 + $0x34] sm:$0xf] %v651
      %694 = vst [vmem:[#allocation8 + $0x38] sm:$0xf] %v652
      %695 = vst [vmem:[#allocation8 + $0x3c] sm:$0xf] %v653
      %696 = vst [vmem:[#allocation8 + $0x40] sm:$0xf] %v654
      %697 = vst [vmem:[#allocation8 + $0x44] sm:$0xf] %v655
      %698 = vst [vmem:[#allocation8 + $0x48] sm:$0xf] %v656
      %699 = vst [vmem:[#allocation8 + $0x4c] sm:$0xf] %v657
      %700 = vst [vmem:[#allocation8 + $0x50] sm:$0xf] %v658
    $region29: #{tpu_custom_call.1} parent=1 // pred_fallthru
      _
    // Predicated region
    $region30: #{tpu_custom_call.1} parent=1 // pred_check
      _
    $region31: #{tpu_custom_call.1} parent=1 // pred_check_branch
      %702 = sbr.rel (0) target = $region33
    $region32: #{tpu_custom_call.1} parent=1 // pred_region
      %s704 = ssub.s32 1344, 1344
      %705 = vsyncadd [#allocation5], %s704
      %s706 = sshll.u32 [#allocation8], 4
      %s707 = int_to_ptr.vmem [resolvable:$true] %s706
      %712 = dma.vmem_to_hbm [thread:$0]  %s707, 1344, %s3, [#allocation5], 64, 64, 4
    $region33: #{tpu_custom_call.1} parent=1 // pred_fallthru
      _
    // Predicated region
    $region34: #{tpu_custom_call.1} parent=1 // pred_check
      _
    $region35: #{tpu_custom_call.1} parent=1 // pred_check_branch
      %714 = sbr.rel (0) target = $region37
    $region36: #{tpu_custom_call.1} parent=1 // pred_region
      %s716 = ssub.s32 128, 128
      %717 = vsyncadd [#allocation10], %s716
      %s719 = sshll.u32 [#allocation9], 4
      %s720 = int_to_ptr.vmem [resolvable:$true] %s719
      %722 = dma.vmem_to_hbm [thread:$0]  %s720, 128, %s4, [#allocation10]
    $region37: #{tpu_custom_call.1} parent=1 // pred_fallthru
      _
    // Predicated region
    $region38: #{tpu_custom_call.1} parent=1 // pred_check
      _
    $region39: #{tpu_custom_call.1} parent=1 // pred_check_branch
      %724 = sbr.rel (0) target = $region41
    $region40: #{tpu_custom_call.1} parent=1 // pred_region
      %s726 = ssub.s32 128, 128
      %727 = vsyncadd [#allocation10], %s726
      %s729 = sshll.u32 [#allocation11], 4
      %s730 = int_to_ptr.vmem [resolvable:$true] %s729
      %732 = dma.vmem_to_hbm [thread:$0]  %s730, 128, %s5, [#allocation10]
    $region41: #{tpu_custom_call.1} parent=1 // pred_fallthru
      _
    // Predicated region
    $region42: #{tpu_custom_call.1} parent=1 // pred_check
      _
    $region43: #{tpu_custom_call.1} parent=1 // pred_check_branch
      %734 = sbr.rel (0) target = $region45
    $region44: #{tpu_custom_call.1} parent=1 // pred_region
      %735 = dma.done [#allocation5], 1344
    $region45: #{tpu_custom_call.1} parent=1 // pred_fallthru
      _
    // Predicated region
    $region46: #{tpu_custom_call.1} parent=1 // pred_check
      _
    $region47: #{tpu_custom_call.1} parent=1 // pred_check_branch
      %737 = sbr.rel (0) target = $region49
    $region48: #{tpu_custom_call.1} parent=1 // pred_region
      %738 = dma.done [#allocation10], 128
    $region49: #{tpu_custom_call.1} parent=1 // pred_fallthru
      _
    // Predicated region
    $region50: #{tpu_custom_call.1} parent=1 // pred_check
      _
    $region51: #{tpu_custom_call.1} parent=1 // pred_check_branch
      %740 = sbr.rel (0) target = $region53
    $region52: #{tpu_custom_call.1} parent=1 // pred_region
      %741 = dma.done [#allocation10], 128
    $region53: #{tpu_custom_call.1} parent=1 // pred_fallthru
      _
    %742 = vsyncpa [#allocation4], 1
    %743 = vsyncpa [#allocation7], 1
    %744 = vsyncpa [#allocation5], 1
    %745 = vsyncpa [#allocation10], 1

</llo_original>
